<compile_context>
chip_gen: v7x
topology: tpu7x:2x2x1
jax: 0.10.0
libtpu: 0.0.40
codegen_flags: <defaults>
</compile_context>

<pallas_src>
import math
from functools import reduce

import jax
import jax.numpy as jnp
from jax.experimental import pallas as pl
from jax.experimental.pallas import tpu as pltpu


_LANE = 128


def _round_up(x, m):
    return ((x + m - 1) // m) * m


def _sublane(dtype):
    # minimum sublane multiple for a packed dtype (8 for f32, 16 bf16, 32 i8)
    return max(8, 32 // jnp.dtype(dtype).itemsize)


def _vmem_capacity_bytes():
    try:
        return int(pltpu.get_tpu_info().vmem_capacity_bytes)
    except Exception:
        return 64 * 1024 * 1024  # conservative fallback (v7x per-TC VMEM)


# ---------------------------------------------------------------------------
# Kernels
# ---------------------------------------------------------------------------
def _proj_kernel_resident(x_ref, w_ref, o_ref):
    # Whole weight (K, N) is one VMEM-resident block; single MXU call per M tile.
    o_ref[...] = jnp.dot(
        x_ref[...].astype(w_ref.dtype), w_ref[...],
        preferred_element_type=jnp.float32,
    ).astype(o_ref.dtype)


def _proj_kernel_tiled_f32out(x_ref, w_ref, o_ref):
    # Grid (i, j, k), k last/"arbitrary".  Output block index is invariant over
    # k so o_ref stays VMEM-resident: accumulate directly into it (f32 out).
    @pl.when(pl.program_id(2) == 0)
    def _():
        o_ref[...] = jnp.zeros_like(o_ref)

    o_ref[...] += jnp.dot(
        x_ref[...].astype(w_ref.dtype), w_ref[...],
        preferred_element_type=jnp.float32,
    )


def _proj_kernel_tiled_acc(x_ref, w_ref, o_ref, acc_ref):
    # Same as above but with an f32 scratch accumulator for non-f32 outputs.
    @pl.when(pl.program_id(2) == 0)
    def _():
        acc_ref[...] = jnp.zeros_like(acc_ref)

    acc_ref[...] += jnp.dot(
        x_ref[...].astype(w_ref.dtype), w_ref[...],
        preferred_element_type=jnp.float32,
    )

    @pl.when(pl.program_id(2) == pl.num_programs(2) - 1)
    def _():
        o_ref[...] = acc_ref[...].astype(o_ref.dtype)


# ---------------------------------------------------------------------------
# Tiling selection (done once at module init)
# ---------------------------------------------------------------------------
def _select_tiling(K, N, *, w_bytes, x_bytes, o_bytes, budget, tm_default=512):
    # 1) weight-resident: whole (K, N) weight as a single block (DMA'd once).
    for tm in (tm_default, 256, 128, 64):
        need = (2 * tm * K * x_bytes      # double-buffered x tiles
                + 2 * K * N * w_bytes     # weight block (counted x2, safe)
                + 2 * tm * N * o_bytes)   # double-buffered out tiles
        if need <= budget:
            return dict(resident=True, tm=tm, tn=N, tk=K, Kp=K, Np=N)

    # 2) general tiled 3-D path.
    tm = tm_default
    tn = min(512, _round_up(N, _LANE))
    tk = min(1024, _round_up(K, _LANE))

    def vmem(tm_, tn_, tk_):
        return (2 * (tm_ * tk_ * x_bytes + tk_ * tn_ * w_bytes)
                + 2 * tm_ * tn_ * o_bytes
                + tm_ * tn_ * 4)

    while vmem(tm, tn, tk) > budget:
        # shrink while preserving (8, 128) alignment
        if tk > _LANE:
            tk = max(_LANE, _round_up(tk // 2, _LANE))
        elif tn > _LANE:
            tn = max(_LANE, _round_up(tn // 2, _LANE))
        elif tm > 8:
            tm = max(8, _round_up(tm // 2, 8))
        else:
            break

    return dict(resident=False, tm=tm, tn=tn, tk=tk,
                Kp=_round_up(K, tk), Np=_round_up(N, tn))


# ---------------------------------------------------------------------------
# Forward
# ---------------------------------------------------------------------------
def _projection_matmul(x, wt, out_features, in_features, tiling, vmem_limit):
    *lead, K = x.shape
    assert K == in_features, f"expected last dim {in_features}, got {K}"
    M = reduce(lambda a, b: a * b, lead, 1)
    out_dtype = x.dtype
    x2d = x.reshape(M, K)

    Kp, Np = tiling["Kp"], tiling["Np"]
    if Kp != K:
        # exact zero-pad ONLY along the reduction axis (needed for correctness)
        x2d = jnp.pad(x2d, ((0, 0), (0, Kp - K)))

    sub = _sublane(x.dtype)
    tm = min(tiling["tm"], _round_up(M, sub))
    # v7x has 2 TensorCores: if a single tile would cover all of a large M,
    # split it so the parallel M axis has at least two tiles.
    if M > 256 and pl.cdiv(M, tm) == 1:
        tm = _round_up(pl.cdiv(M, 2), sub)
    grid_m = pl.cdiv(M, tm)

    x_bytes = jnp.dtype(x.dtype).itemsize
    w_bytes = jnp.dtype(wt.dtype).itemsize
    o_bytes = jnp.dtype(out_dtype).itemsize
    cost = pl.CostEstimate(
        flops=2 * M * out_features * in_features,
        transcendentals=0,
        bytes_accessed=(M * in_features * x_bytes
                        + in_features * out_features * w_bytes
                        + M * out_features * o_bytes),
    )

    if tiling["resident"]:
        params = pltpu.CompilerParams(
            dimension_semantics=("parallel",), vmem_limit_bytes=vmem_limit)
        y2d = pl.pallas_call(
            _proj_kernel_resident,
            out_shape=jax.ShapeDtypeStruct((M, out_features), out_dtype),
            grid_spec=pltpu.PrefetchScalarGridSpec(
                num_scalar_prefetch=0,
                grid=(grid_m,),
                in_specs=[
                    pl.BlockSpec((tm, Kp), lambda i: (i, 0)),     # x tile
                    pl.BlockSpec((Kp, Np), lambda i: (0, 0)),     # whole weight, one DMA
                ],
                out_specs=pl.BlockSpec((tm, Np), lambda i: (i, 0)),
            ),
            compiler_params=params,
            cost_estimate=cost,
        )(x2d, wt)
    else:
        tn, tk = tiling["tn"], tiling["tk"]
        params = pltpu.CompilerParams(
            dimension_semantics=("parallel", "parallel", "arbitrary"),
            vmem_limit_bytes=vmem_limit)
        if out_dtype == jnp.float32:
            kernel, scratch = _proj_kernel_tiled_f32out, []
        else:
            kernel, scratch = _proj_kernel_tiled_acc, [pltpu.VMEM((tm, tn), jnp.float32)]
        y2d = pl.pallas_call(
            kernel,
            out_shape=jax.ShapeDtypeStruct((M, out_features), out_dtype),
            grid_spec=pltpu.PrefetchScalarGridSpec(
                num_scalar_prefetch=0,
                grid=(grid_m, Np // tn, Kp // tk),
                in_specs=[
                    pl.BlockSpec((tm, tk), lambda i, j, k: (i, k)),   # x tile
                    pl.BlockSpec((tk, tn), lambda i, j, k: (k, j)),   # w^T tile (in, out)
                ],
                out_specs=pl.BlockSpec((tm, tn), lambda i, j, k: (i, j)),
                scratch_shapes=scratch,
            ),
            compiler_params=params,
            cost_estimate=cost,
        )(x2d, wt)

    return y2d.reshape(*lead, out_features)


class RandomProjection:
    """Pallas-TPU equivalent of the PyTorch RandomProjection module.

    Weight preparation (transpose to (in, out), cast to the compute dtype and
    padding to the tile grid) happens once here, not per forward call.
    compute_dtype=jnp.bfloat16 is an opt-in fast path (f32 accumulation);
    the default keeps the weight dtype for F.linear-exact results.
    """

    def __init__(self, in_features, out_features, *, key=None, weight=None,
                 compute_dtype=jnp.float32, tm=512):
        self.in_features = in_features
        self.out_features = out_features
        if weight is None:
            if key is None:
                key = jax.random.PRNGKey(0)
            weight = kaiming_uniform_weight(key, out_features, in_features)
        assert weight.shape == (out_features, in_features)

        capacity = _vmem_capacity_bytes()
        self._vmem_limit = int(capacity * 0.75)
        budget = int(capacity * 0.60)

        self._tiling = _select_tiling(
            in_features, out_features,
            w_bytes=jnp.dtype(compute_dtype).itemsize,
            x_bytes=4, o_bytes=4,            # conservative (f32 activations)
            budget=budget, tm_default=tm)

        wt = weight.T.astype(compute_dtype)                     # (in, out)
        Kp, Np = self._tiling["Kp"], self._tiling["Np"]
        if (Kp, Np) != (in_features, out_features):
            wt = jnp.pad(wt, ((0, Kp - in_features), (0, Np - out_features)))
        self.wt = wt

    def __call__(self, x):
        return _projection_matmul(x, self.wt, self.out_features,
                                  self.in_features, self._tiling,
                                  self._vmem_limit)


def random_projection_forward(x, weight, *, compute_dtype=None):
    """One-shot functional form (prepares the weight per call; prefer the
    RandomProjection class when reusing the same weight across calls)."""
    if compute_dtype is None:
        compute_dtype = x.dtype
    mod = RandomProjection(weight.shape[1], weight.shape[0], weight=weight,
                           compute_dtype=compute_dtype)
    return mod(x)


def kaiming_uniform_weight(key, out_features, in_features, a=math.sqrt(5.0)):
    """Deterministic nn.init.kaiming_uniform_(weight, a=sqrt(5)) equivalent."""
    fan_in = in_features
    gain = math.sqrt(2.0 / (1.0 + a * a))
    bound = gain * math.sqrt(3.0 / fan_in)
    return jax.random.uniform(
        key, (out_features, in_features), dtype=jnp.float32,
        minval=-bound, maxval=bound,
    )


if __name__ == "__main__":
    in_features = 32
    out_features = 64
    batch, seq = 2, 8

    key = jax.random.PRNGKey(0)
    kx, kw = jax.random.split(key)

    x = jax.random.normal(kx, (batch, seq, in_features), dtype=jnp.float32)
    weight = kaiming_uniform_weight(kw, out_features, in_features)

    y_ref = jnp.einsum("bsk,nk->bsn", x, weight)

    # exact f32 path — matches F.linear
    proj = RandomProjection(in_features, out_features, weight=weight,
                            compute_dtype=jnp.float32)
    y = jax.block_until_ready(proj(x))
    assert y.shape == (batch, seq, out_features)
    assert jnp.allclose(y, y_ref, atol=1e-5, rtol=1e-5)

    # opt-in bf16-compute path (MXU native rate, f32 accumulation)
    proj_bf16 = RandomProjection(in_features, out_features, weight=weight,
                                 compute_dtype=jnp.bfloat16)
    y_bf16 = jax.block_until_ready(proj_bf16(x))
    assert jnp.allclose(y_bf16, y_ref, atol=5e-2, rtol=5e-2)

    print("KERNEL_OK")
</pallas_src>

<mosaic_0001>
module attributes {stable_mosaic.version = 11 : i64} {
  func.func @_proj_kernel_resident(%arg0: i32, %arg1: memref<16x32xf32, #tpu.memory_space<vmem>>, %arg2: memref<32x64xf32, #tpu.memory_space<vmem>>, %arg3: memref<16x64xf32, #tpu.memory_space<vmem>>) attributes {dimension_semantics = [#tpu.dimension_semantics<parallel>], iteration_bounds = array<i64: 1>, scalar_prefetch = 0 : i64, scratch_operands = 0 : i64, tpu.core_type = #tpu.core_type<tc>, window_params = [{transform_indices = @transform_0, window_bounds = array<i64: 16, 32>}, {pipeline_mode = #tpu.pipeline_mode<synchronous>, transform_indices = @transform_1, window_bounds = array<i64: 32, 64>}, {transform_indices = @transform_2, window_bounds = array<i64: 16, 64>}]} {
    %c0 = arith.constant 0 : index
    %c0_0 = arith.constant 0 : index
    %0 = vector.load %arg1[%c0, %c0_0] : memref<16x32xf32, #tpu.memory_space<vmem>>, vector<16x32xf32>
    %c0_1 = arith.constant 0 : index
    %c0_2 = arith.constant 0 : index
    %1 = vector.load %arg2[%c0_1, %c0_2] : memref<32x64xf32, #tpu.memory_space<vmem>>, vector<32x64xf32>
    %cst = arith.constant dense<0.000000e+00> : vector<16x64xf32>
    %2 = tpu.matmul %0, %1, %cst {dimension_numbers = #tpu.dot_dimension_numbers<[1], [0], [0], [1], [0, 0, 1, 1], [], []>} : vector<16x32xf32>, vector<32x64xf32>, vector<16x64xf32> -> vector<16x64xf32>
    %c0_3 = arith.constant 0 : index
    %c0_4 = arith.constant 0 : index
    %3 = vector.load %arg3[%c0_3, %c0_4] : memref<16x64xf32, #tpu.memory_space<vmem>>, vector<16x64xf32>
    tpu.vector_store %arg3[%c0_3, %c0_4], %2 {strides = array<i32>} : memref<16x64xf32, #tpu.memory_space<vmem>>, vector<16x64xf32>,
    return
  }
  func.func @transform_0(%arg0: i32) -> (i32, i32) {
    %c0_i32 = arith.constant 0 : i32
    %c0_i32_0 = arith.constant 0 : i32
    return %arg0, %c0_i32 : i32, i32
  }
  func.func @transform_1(%arg0: i32) -> (i32, i32) {
    %c0_i32 = arith.constant 0 : i32
    %c0_i32_0 = arith.constant 0 : i32
    %c0_i32_1 = arith.constant 0 : i32
    return %c0_i32, %c0_i32_0 : i32, i32
  }
  func.func @transform_2(%arg0: i32) -> (i32, i32) {
    %c0_i32 = arith.constant 0 : i32
    %c0_i32_0 = arith.constant 0 : i32
    return %arg0, %c0_i32 : i32, i32
  }
}

</mosaic_0001>

<llo_original>
// kernel: tpu_custom_call.1
$region0: #{tpu_custom_call.1}
  #allocation0 [shape = 'u32[]', space=smem, size = 0x4, offset = 0x4, fixed_abs, tag = 'smem constant byte address 0x4 - core index']
  #allocation1 [shape = 'u32[144,128]{1,0:T(1,128)}', space=vmem, size = 0x12000, scoped, tag = 'internal scratch']
  %s0 = inlined_call_operand.hbm [shape: f32[16,32], index: 0, kind: input, shape index: {}]
  %s1 = inlined_call_operand.hbm [shape: f32[32,64], index: 1, kind: input, shape index: {}]
  %s2 = inlined_call_operand.hbm [shape: f32[16,64], index: 2, kind: output, shape index: {}]
  %s3 = sld [smem:[#allocation0]]
  $region26: #{tpu_custom_call.1} parent=0
    _
  %s5 = ssub.s32 1, %s3
  %s6 = scalar_select 0, %s5, %s3
  $region1: #{tpu_custom_call.1} parent=0
    #allocation2 [shape = 'u8[8192]{0}', space=vmem, size = 0x2000, scoped, tag = 'input window, operand 0, single buffered']
    #allocation3 [shape = 's32[1]{0}', space=sflag, size = 0x4, scoped, tag = 'scoped memory for tpu_custom_call.1']
    #allocation4 [shape = 's32[1]{0}', space=sflag, size = 0x4, scoped, tag = 'scoped memory for tpu_custom_call.1']
    #allocation5 [shape = 'u8[16384]{0}', space=vmem, size = 0x4000, scoped, tag = 'input window, operand 1, single buffered']
    #allocation6 [shape = 's32[1]{0}', space=sflag, size = 0x4, scoped, tag = 'scoped memory for tpu_custom_call.1']
    #allocation7 [shape = 'u8[8192]{0}', space=vmem, size = 0x2000, scoped, tag = 'output window, operand 0, single buffered']
    %7 = vsyncpa [#allocation3], 0
    %8 = vsyncpa [#allocation6], 0
    %9 = vsyncpa [#allocation4], 0
    // Predicated region
    $region2: #{tpu_custom_call.1} parent=1 // pred_check
      _
    $region3: #{tpu_custom_call.1} parent=1 // pred_check_branch
      %11 = sbr.rel (0) target = $region5
    $region4: #{tpu_custom_call.1} parent=1 // pred_region
      %s13 = ssub.s32 256, 256
      %14 = vsyncadd [#allocation3], %s13
      %s15 = sshll.u32 [#allocation2], 4
      %s16 = int_to_ptr.vmem [resolvable:$true] %s15
      %21 = dma.hbm_to_vmem [thread:$0]  %s0, 256, %s16, [#allocation3], 128, 128, 8
    $region5: #{tpu_custom_call.1} parent=1 // pred_fallthru
      _
    // Predicated region
    $region6: #{tpu_custom_call.1} parent=1 // pred_check
      _
    $region7: #{tpu_custom_call.1} parent=1 // pred_check_branch
      %23 = sbr.rel (0) target = $region9
    $region8: #{tpu_custom_call.1} parent=1 // pred_region
      %s25 = ssub.s32 512, 512
      %26 = vsyncadd [#allocation6], %s25
      %s27 = sshll.u32 [#allocation5], 4
      %s28 = int_to_ptr.vmem [resolvable:$true] %s27
      %33 = dma.hbm_to_vmem [thread:$0]  %s1, 512, %s28, [#allocation6], 128, 128, 8
    $region9: #{tpu_custom_call.1} parent=1 // pred_fallthru
      _
    // Predicated region
    $region10: #{tpu_custom_call.1} parent=1 // pred_check
      _
    $region11: #{tpu_custom_call.1} parent=1 // pred_check_branch
      %35 = sbr.rel (0) target = $region13
    $region12: #{tpu_custom_call.1} parent=1 // pred_region
      %36 = dma.done [#allocation3], 256
    $region13: #{tpu_custom_call.1} parent=1 // pred_fallthru
      _
    // Predicated region
    $region14: #{tpu_custom_call.1} parent=1 // pred_check
      _
    $region15: #{tpu_custom_call.1} parent=1 // pred_check_branch
      %38 = sbr.rel (0) target = $region17
    $region16: #{tpu_custom_call.1} parent=1 // pred_region
      %39 = dma.done [#allocation6], 512
    $region17: #{tpu_custom_call.1} parent=1 // pred_fallthru
      _
    %v40 = vld [vmem:[#allocation2] sm:$0xff]
    %v41 = vld [vmem:[#allocation2 + $0x8] sm:$0xff]
    %v42 = vld [vmem:[#allocation5] sm:$0xff]
    %v43 = vld [vmem:[#allocation5 + $0x8] sm:$0xff]
    %v44 = vld [vmem:[#allocation5 + $0x10] sm:$0xff]
    %v45 = vld [vmem:[#allocation5 + $0x18] sm:$0xff]
    %vm46 = vcmask 261120
    %v48 = vsel %vm46, %v40, 0
    %v51 = vsel %vm46, %v41, 0
    %53 = vmatprep.subr.mxu0 0.0
    %54 = vmatpush1.msra.mxu0 %v42
    %55 = vmatprep.subr.mxu0 0.0
    %56 = vmatpush1.msra.mxu0 %v43
    %57 = vmatprep.subr.mxu0 0.0
    %58 = vmatpush1.msra.mxu0 %v44
    %59 = vmatprep.subr.mxu0 0.0
    %60 = vmatpush1.msra.mxu0 %v45
    %61 = vmatprep.subr.mxu0 0.0
    %62 = vmatpush1.msra.mxu0 0.0
    %63 = vmatprep.subr.mxu0 0.0
    %64 = vmatpush1.msra.mxu0 0.0
    %65 = vmatprep.subr.mxu0 0.0
    %66 = vmatpush1.msra.mxu0 0.0
    %67 = vmatprep.subr.mxu0 0.0
    %68 = vmatpush1.msra.mxu0 0.0
    %69 = vmatprep.subr.mxu0 0.0
    %70 = vmatpush1.msra.mxu0 0.0
    %71 = vmatprep.subr.mxu0 0.0
    %72 = vmatpush1.msra.mxu0 0.0
    %73 = vmatprep.subr.mxu0 0.0
    %74 = vmatpush1.msra.mxu0 0.0
    %75 = vmatprep.subr.mxu0 0.0
    %76 = vmatpush1.msra.mxu0 0.0
    %77 = vmatprep.subr.mxu0 0.0
    %78 = vmatpush1.msra.mxu0 0.0
    %79 = vmatprep.subr.mxu0 0.0
    %80 = vmatpush1.msra.mxu0 0.0
    %81 = vmatprep.subr.mxu0 0.0
    %82 = vmatpush1.msra.mxu0 0.0
    %83 = vmatprep.subr.mxu0 0.0
    %84 = vmatpush1.msra.mxu0 0.0
    %85 = vmatprep.subr.mxu0 0.0
    %86 = vmatpush1.msra.mxu0 0.0
    %87 = vmatprep.subr.mxu0 0.0
    %88 = vmatpush1.msra.mxu0 0.0
    %89 = vmatprep.subr.mxu0 0.0
    %90 = vmatpush1.msra.mxu0 0.0
    %91 = vmatprep.subr.mxu0 0.0
    %92 = vmatpush1.msra.mxu0 0.0
    %93 = vmatprep.subr.mxu0 0.0
    %94 = vmatpush1.msra.mxu0 0.0
    %95 = vmatprep.subr.mxu0 0.0
    %96 = vmatpush1.msra.mxu0 0.0
    %97 = vmatprep.subr.mxu0 0.0
    %98 = vmatpush1.msra.mxu0 0.0
    %99 = vmatprep.subr.mxu0 0.0
    %100 = vmatpush1.msra.mxu0 0.0
    %101 = vmatprep.subr.mxu0 0.0
    %102 = vmatpush1.msra.mxu0 0.0
    %103 = vmatprep.subr.mxu0 0.0
    %104 = vmatpush1.msra.mxu0 0.0
    %105 = vmatprep.subr.mxu0 0.0
    %106 = vmatpush1.msra.mxu0 0.0
    %107 = vmatprep.subr.mxu0 0.0
    %108 = vmatpush1.msra.mxu0 0.0
    %109 = vmatprep.subr.mxu0 0.0
    %110 = vmatpush1.msra.mxu0 0.0
    %111 = vmatprep.subr.mxu0 0.0
    %112 = vmatpush1.msra.mxu0 0.0
    %113 = vmatprep.subr.mxu0 0.0
    %114 = vmatpush1.msra.mxu0 0.0
    %115 = vmatprep.subr.mxu0 0.0
    %116 = vmatpush1.msra.mxu0 0.0
    %117 = vmatprep.mubr.f32.mxu0 0.0
    %118 = vmatmul.mubr.f32.gmra.mrb[0].mxu0 %v48
    %v119 = vpop.f32.mrb[0].mxu0
    %v120 = vadd.f32 0.0, %v119
    %v121 = vpop.f32.mrb[0].mxu0
    %122 = vmatprep.mubr.f32.mxu0 0.0
    %123 = vmatmul.mubr.f32.gmra.mrb[0].mxu0 %v51
    %v124 = vpop.f32.mrb[0].mxu0
    %v125 = vadd.f32 0.0, %v124
    %v126 = vpop.f32.mrb[0].mxu0
    %127 = vdwg.mxu0
    %vm128 = vcmask 523264
    %129 = vst.msk [vmem:[#allocation7] sm:$0xff] %vm128, %v120
    %130 = vst.msk [vmem:[#allocation7 + $0x8] sm:$0xff] %vm128, %v125
    // Predicated region
    $region18: #{tpu_custom_call.1} parent=1 // pred_check
      _
    $region19: #{tpu_custom_call.1} parent=1 // pred_check_branch
      %132 = sbr.rel (0) target = $region21
    $region20: #{tpu_custom_call.1} parent=1 // pred_region
      %s134 = ssub.s32 256, 256
      %135 = vsyncadd [#allocation4], %s134
      %s136 = sshll.u32 [#allocation7], 4
      %s137 = int_to_ptr.vmem [resolvable:$true] %s136
      %142 = dma.vmem_to_hbm [thread:$0]  %s137, 256, %s2, [#allocation4], 128, 128, 8
    $region21: #{tpu_custom_call.1} parent=1 // pred_fallthru
      _
    // Predicated region
    $region22: #{tpu_custom_call.1} parent=1 // pred_check
      _
    $region23: #{tpu_custom_call.1} parent=1 // pred_check_branch
      %144 = sbr.rel (0) target = $region25
    $region24: #{tpu_custom_call.1} parent=1 // pred_region
      %145 = dma.done [#allocation4], 256
    $region25: #{tpu_custom_call.1} parent=1 // pred_fallthru
      _
    %146 = vsyncpa [#allocation3], 1
    %147 = vsyncpa [#allocation6], 1
    %148 = vsyncpa [#allocation4], 1

</llo_original>
